<compile_context>
chip_gen: v5e
topology: v5e:2x2
jax: 0.10.0
libtpu: 0.0.40
codegen_flags: <defaults>
</compile_context>

<pallas_src>
import functools

import jax
import jax.numpy as jnp
from jax.experimental import pallas as pl
from jax.experimental.pallas import tpu as pltpu


def mlp_kernel(x_ref, w1_ref, b1_ref, w2_ref, b2_ref, o_ref):
    # fc1 on the MXU, f32 in / f32 accumulate: [tb, D] @ [D, H] -> [tb, H].
    h = jnp.dot(x_ref[...], w1_ref[...], preferred_element_type=jnp.float32)
    h = jnp.maximum(h + b1_ref[...], 0.0)                     # bias + ReLU (f32)

    # fc2 (output width 1), lane-dense: contract the [1, H] weight row against
    # h's H axis so the result lands directly as a [1, tb] row (unmasked lane-
    # dense store) instead of a [tb, 1] column of width-1 masked stores.
    z = jax.lax.dot_general(
        w2_ref[...], h, (((1,), (1,)), ((), ())),
        preferred_element_type=jnp.float32,
    )                                                         # [1, tb]
    z = z + b2_ref[0]                                         # scalar bias from SMEM
    o_ref[0] = jax.nn.sigmoid(z).astype(o_ref.dtype)          # o_ref block: (1, 1, tb)


@functools.partial(jax.jit, static_argnames=("block_b",))
def mlp_forward(x, w1, b1, w2, b2, *, block_b=1024):
    """x: [B, D]; w1: [D, H]; b1: [1, H]; w2: [1, H] row; b2: [1]. Returns [B, 1]."""
    B, D = x.shape
    H = w1.shape[1]

    if B <= block_b:
        # Single grid step: no per-step overhead, no padding / extra copy of x.
        # (On v7x one can pass a smaller block_b to get >= 2 steps and use both
        # TensorCores; at these sizes it makes no measurable difference.)
        tb = B
    else:
        tb = block_b  # multiple of 128: lane-dense output rows, aligned x tiles
    num_tiles = pl.cdiv(B, tb)

    bytes_accessed = 4 * (x.size + w1.size + b1.size + w2.size + b2.size + B)
    cost = pl.CostEstimate(
        flops=2 * B * D * H + 4 * B * H,
        transcendentals=B,                    # one sigmoid exp per row
        bytes_accessed=int(bytes_accessed),
    )

    out = pl.pallas_call(
        mlp_kernel,
        out_shape=jax.ShapeDtypeStruct((num_tiles, 1, tb), jnp.float32),
        grid=(num_tiles,),
        in_specs=[
            pl.BlockSpec((tb, D), lambda i: (i, 0)),   # x: streamed per batch tile
            pl.BlockSpec((D, H), lambda i: (0, 0)),    # w1: VMEM-resident across steps
            pl.BlockSpec((1, H), lambda i: (0, 0)),    # b1: VMEM-resident
            pl.BlockSpec((1, H), lambda i: (0, 0)),    # w2 row: VMEM-resident
            pl.BlockSpec(memory_space=pltpu.SMEM),     # b2: (1,) scalar on scalar path
        ],
        out_specs=pl.BlockSpec((1, 1, tb), lambda i: (i, 0, 0)),  # lane-dense rows
        compiler_params=pltpu.CompilerParams(
            dimension_semantics=("parallel",),          # both TCs on v7x when >1 step
        ),
        cost_estimate=cost,
    )(x, w1, b1, w2, b2)

    # (num_tiles, 1, tb) -> flat batch order -> trim ragged tail -> (B, 1).
    return out.reshape(-1, 1)[:B]


def init_params(key, input_dim, hidden_dim=32):
    """Deterministic init mimicking nn.Linear's U(-1/sqrt(fan_in), 1/sqrt(fan_in))."""
    k1, k2, k3, k4 = jax.random.split(key, 4)
    bound1 = 1.0 / jnp.sqrt(input_dim)
    bound2 = 1.0 / jnp.sqrt(hidden_dim)
    # w1 stored as [D, H] (= fc1.weight.T) for x @ W1; w2 as [1, H] (= fc2.weight).
    w1 = jax.random.uniform(k1, (input_dim, hidden_dim), jnp.float32, -bound1, bound1)
    b1 = jax.random.uniform(k2, (1, hidden_dim), jnp.float32, -bound1, bound1)
    w2 = jax.random.uniform(k3, (1, hidden_dim), jnp.float32, -bound2, bound2)
    b2 = jax.random.uniform(k4, (1,), jnp.float32, -bound2, bound2)
    return w1, b1, w2, b2


if __name__ == "__main__":
    key = jax.random.PRNGKey(0)
    kx, kp = jax.random.split(key)

    # Small, deterministic demo shapes consistent with the module.
    batch, input_dim, hidden_dim = 256, 16, 32
    x = jax.random.normal(kx, (batch, input_dim), jnp.float32)
    w1, b1, w2, b2 = init_params(kp, input_dim, hidden_dim)

    out = jax.block_until_ready(mlp_forward(x, w1, b1, w2, b2))
    assert out.shape == (batch, 1)

    # f32 reference (same math as the PyTorch forward), highest-precision dots.
    h_ref = jnp.maximum(jnp.dot(x, w1, precision="highest") + b1, 0.0)
    y_ref = jax.nn.sigmoid(jnp.dot(h_ref, w2.T, precision="highest") + b2)
    err = float(jnp.max(jnp.abs(out - y_ref)))
    assert jnp.allclose(out, y_ref, atol=2e-3, rtol=2e-3), f"max abs err {err}"

    print("KERNEL_OK")
</pallas_src>

<mosaic_0001>
module attributes {stable_mosaic.version = 11 : i64} {
  func.func @mlp_kernel(%arg0: i32, %arg1: memref<256x16xf32, #tpu.memory_space<vmem>>, %arg2: memref<16x32xf32, #tpu.memory_space<vmem>>, %arg3: memref<1x32xf32, #tpu.memory_space<vmem>>, %arg4: memref<1x32xf32, #tpu.memory_space<vmem>>, %arg5: memref<1xf32, #tpu.memory_space<smem>>, %arg6: memref<1x1x256xf32, #tpu.memory_space<vmem>>) attributes {dimension_semantics = [#tpu.dimension_semantics<parallel>], iteration_bounds = array<i64: 1>, scalar_prefetch = 0 : i64, scratch_operands = 0 : i64, tpu.core_type = #tpu.core_type<tc>, window_params = [{transform_indices = @transform_0, window_bounds = array<i64: 256, 16>}, {pipeline_mode = #tpu.pipeline_mode<synchronous>, transform_indices = @transform_1, window_bounds = array<i64: 16, 32>}, {pipeline_mode = #tpu.pipeline_mode<synchronous>, transform_indices = @transform_2, window_bounds = array<i64: 1, 32>}, {pipeline_mode = #tpu.pipeline_mode<synchronous>, transform_indices = @transform_3, window_bounds = array<i64: 1, 32>}, {transform_indices = @transform_4, window_bounds = array<i64: 1>}, {transform_indices = @transform_5, window_bounds = array<i64: 1, 1, 256>}]} {
    %c0 = arith.constant 0 : index
    %c0_0 = arith.constant 0 : index
    %0 = vector.load %arg1[%c0, %c0_0] : memref<256x16xf32, #tpu.memory_space<vmem>>, vector<256x16xf32>
    %c0_1 = arith.constant 0 : index
    %c0_2 = arith.constant 0 : index
    %1 = vector.load %arg2[%c0_1, %c0_2] : memref<16x32xf32, #tpu.memory_space<vmem>>, vector<16x32xf32>
    %cst = arith.constant dense<0.000000e+00> : vector<256x32xf32>
    %2 = tpu.matmul %0, %1, %cst {dimension_numbers = #tpu.dot_dimension_numbers<[1], [0], [0], [1], [0, 0, 1, 1], [], []>} : vector<256x16xf32>, vector<16x32xf32>, vector<256x32xf32> -> vector<256x32xf32>
    %c0_3 = arith.constant 0 : index
    %c0_4 = arith.constant 0 : index
    %3 = vector.load %arg3[%c0_3, %c0_4] : memref<1x32xf32, #tpu.memory_space<vmem>>, vector<1x32xf32>
    %4 = vector.broadcast %3 : vector<1x32xf32> to vector<256x32xf32>
    %5 = arith.addf %2, %4 : vector<256x32xf32>
    %cst_5 = arith.constant 0.000000e+00 : f32
    %6 = vector.broadcast %cst_5 : f32 to vector<256x32xf32>
    %7 = arith.maximumf %5, %6 : vector<256x32xf32>
    %c0_6 = arith.constant 0 : index
    %c0_7 = arith.constant 0 : index
    %8 = vector.load %arg4[%c0_6, %c0_7] : memref<1x32xf32, #tpu.memory_space<vmem>>, vector<1x32xf32>
    %cst_8 = arith.constant dense<0.000000e+00> : vector<1x256xf32>
    %9 = tpu.matmul %8, %7, %cst_8 {dimension_numbers = #tpu.dot_dimension_numbers<[1], [1], [0], [0], [0, 0, 1, 0], [], []>} : vector<1x32xf32>, vector<256x32xf32>, vector<1x256xf32> -> vector<1x256xf32>
    %c0_9 = arith.constant 0 : index
    %10 = memref.load %arg5[%c0_9] : memref<1xf32, #tpu.memory_space<smem>>
    %11 = vector.broadcast %10 : f32 to vector<1x256xf32>
    %12 = arith.addf %9, %11 : vector<1x256xf32>
    %13 = arith.negf %12 : vector<1x256xf32>
    %14 = math.exp %13 : vector<1x256xf32>
    %cst_10 = arith.constant 1.000000e+00 : f32
    %15 = vector.broadcast %cst_10 : f32 to vector<1x256xf32>
    %16 = arith.addf %15, %14 : vector<1x256xf32>
    %17 = arith.divf %15, %16 : vector<1x256xf32>
    %c0_11 = arith.constant 0 : index
    %c0_12 = arith.constant 0 : index
    %c0_13 = arith.constant 0 : index
    %18 = vector.load %arg6[%c0_11, %c0_12, %c0_13] : memref<1x1x256xf32, #tpu.memory_space<vmem>>, vector<1x1x256xf32>
    %19 = vector.shape_cast %18 : vector<1x1x256xf32> to vector<1x256xf32>
    %20 = vector.shape_cast %17 : vector<1x256xf32> to vector<1x1x256xf32>
    tpu.vector_store %arg6[%c0_11, %c0_12, %c0_13], %20 {strides = array<i32>} : memref<1x1x256xf32, #tpu.memory_space<vmem>>, vector<1x1x256xf32>,
    return
  }
  func.func @transform_0(%arg0: i32) -> (i32, i32) {
    %c0_i32 = arith.constant 0 : i32
    %c0_i32_0 = arith.constant 0 : i32
    return %arg0, %c0_i32 : i32, i32
  }
  func.func @transform_1(%arg0: i32) -> (i32, i32) {
    %c0_i32 = arith.constant 0 : i32
    %c0_i32_0 = arith.constant 0 : i32
    %c0_i32_1 = arith.constant 0 : i32
    return %c0_i32, %c0_i32_0 : i32, i32
  }
  func.func @transform_2(%arg0: i32) -> (i32, i32) {
    %c0_i32 = arith.constant 0 : i32
    %c0_i32_0 = arith.constant 0 : i32
    %c0_i32_1 = arith.constant 0 : i32
    return %c0_i32, %c0_i32_0 : i32, i32
  }
  func.func @transform_3(%arg0: i32) -> (i32, i32) {
    %c0_i32 = arith.constant 0 : i32
    %c0_i32_0 = arith.constant 0 : i32
    %c0_i32_1 = arith.constant 0 : i32
    return %c0_i32, %c0_i32_0 : i32, i32
  }
  func.func @transform_4(%arg0: i32) -> i32 {
    %c0_i32 = arith.constant 0 : i32
    %c0_i32_0 = arith.constant 0 : i32
    return %c0_i32 : i32
  }
  func.func @transform_5(%arg0: i32) -> (i32, i32, i32) {
    %c0_i32 = arith.constant 0 : i32
    %c0_i32_0 = arith.constant 0 : i32
    %c0_i32_1 = arith.constant 0 : i32
    return %arg0, %c0_i32, %c0_i32_0 : i32, i32, i32
  }
}

</mosaic_0001>

<llo_original>
// kernel: mlp_forward.1
$region0: #{mlp_forward.1}
  #allocation0 [shape = 'u32[]', space=smem, size = 0x4, offset = 0x4, fixed_abs, tag = 'smem constant byte address 0x4 - core index']
  #allocation1 [shape = 'u32[72,128]{1,0:T(1,128)}', space=vmem, size = 0x9000, scoped, tag = 'internal scratch']
  #allocation2 [shape = 'f32[1]{0:T(128)S(6)}', space=smem, size = 0x200, scoped, tag = 'scoped memory for mlp_forward.1']
  %s0 = inlined_call_operand.vmem [shape: f32[256,16], index: 0, kind: input, shape index: {}]
  %s1 = inlined_call_operand.vmem [shape: f32[16,32], index: 1, kind: input, shape index: {}]
  %s2 = inlined_call_operand.vmem [shape: f32[1,32], index: 2, kind: input, shape index: {}]
  %s3 = inlined_call_operand.vmem [shape: f32[1,32], index: 3, kind: input, shape index: {}]
  %s4 = inlined_call_operand.<no memory space> [shape: f32[1], index: 4, kind: input, shape index: {}]
  %s5 = inlined_call_operand.hbm [shape: f32[1,1,256], index: 5, kind: output, shape index: {}]
  %s6 = sld [smem:[#allocation0]]
  $region30: #{mlp_forward.1} parent=0
    _
  %s8 = ssub.s32 1, %s6
  %s9 = scalar_select 0, %s8, %s6
  %10 = sst [smem:[#allocation2]] %s4
  $region1: #{mlp_forward.1} parent=0
    #allocation3 [shape = 'u8[1024]{0}', space=vmem, size = 0x400, scoped, tag = 'output window, operand 0, single buffered']
    #allocation4 [shape = 's32[1]{0}', space=sflag, size = 0x4, scoped, tag = 'scoped memory for mlp_forward.1']
    %11 = vsyncpa [#allocation4], 0
    // Predicated region
    $region2: #{mlp_forward.1} parent=1 // pred_check
      _
    $region3: #{mlp_forward.1} parent=1 // pred_check_branch
      %13 = sbr.rel (0) target = $region5
    $region4: #{mlp_forward.1} parent=1 // pred_region
      _
    $region5: #{mlp_forward.1} parent=1 // pred_fallthru
      _
    // Predicated region
    $region6: #{mlp_forward.1} parent=1 // pred_check
      _
    $region7: #{mlp_forward.1} parent=1 // pred_check_branch
      %15 = sbr.rel (0) target = $region9
    $region8: #{mlp_forward.1} parent=1 // pred_region
      _
    $region9: #{mlp_forward.1} parent=1 // pred_fallthru
      _
    // Predicated region
    $region10: #{mlp_forward.1} parent=1 // pred_check
      _
    $region11: #{mlp_forward.1} parent=1 // pred_check_branch
      %17 = sbr.rel (0) target = $region13
    $region12: #{mlp_forward.1} parent=1 // pred_region
      _
    $region13: #{mlp_forward.1} parent=1 // pred_fallthru
      _
    // Predicated region
    $region14: #{mlp_forward.1} parent=1 // pred_check
      _
    $region15: #{mlp_forward.1} parent=1 // pred_check_branch
      %19 = sbr.rel (0) target = $region17
    $region16: #{mlp_forward.1} parent=1 // pred_region
      _
    $region17: #{mlp_forward.1} parent=1 // pred_fallthru
      _
    // Predicated region
    $region18: #{mlp_forward.1} parent=1 // pred_check
      _
    $region19: #{mlp_forward.1} parent=1 // pred_check_branch
      %21 = sbr.rel (0) target = $region21
    $region20: #{mlp_forward.1} parent=1 // pred_region
      _
    $region21: #{mlp_forward.1} parent=1 // pred_fallthru
      _
    %v22 = vld [vmem:[%s0] sm:$0xff]
    %v23 = vld [vmem:[%s0 + $0x8] sm:$0xff]
    %v24 = vld [vmem:[%s0 + $0x10] sm:$0xff]
    %v25 = vld [vmem:[%s0 + $0x18] sm:$0xff]
    %v26 = vld [vmem:[%s0 + $0x20] sm:$0xff]
    %v27 = vld [vmem:[%s0 + $0x28] sm:$0xff]
    %v28 = vld [vmem:[%s0 + $0x30] sm:$0xff]
    %v29 = vld [vmem:[%s0 + $0x38] sm:$0xff]
    %v30 = vld [vmem:[%s0 + $0x40] sm:$0xff]
    %v31 = vld [vmem:[%s0 + $0x48] sm:$0xff]
    %v32 = vld [vmem:[%s0 + $0x50] sm:$0xff]
    %v33 = vld [vmem:[%s0 + $0x58] sm:$0xff]
    %v34 = vld [vmem:[%s0 + $0x60] sm:$0xff]
    %v35 = vld [vmem:[%s0 + $0x68] sm:$0xff]
    %v36 = vld [vmem:[%s0 + $0x70] sm:$0xff]
    %v37 = vld [vmem:[%s0 + $0x78] sm:$0xff]
    %v38 = vld [vmem:[%s0 + $0x80] sm:$0xff]
    %v39 = vld [vmem:[%s0 + $0x88] sm:$0xff]
    %v40 = vld [vmem:[%s0 + $0x90] sm:$0xff]
    %v41 = vld [vmem:[%s0 + $0x98] sm:$0xff]
    %v42 = vld [vmem:[%s0 + $0xa0] sm:$0xff]
    %v43 = vld [vmem:[%s0 + $0xa8] sm:$0xff]
    %v44 = vld [vmem:[%s0 + $0xb0] sm:$0xff]
    %v45 = vld [vmem:[%s0 + $0xb8] sm:$0xff]
    %v46 = vld [vmem:[%s0 + $0xc0] sm:$0xff]
    %v47 = vld [vmem:[%s0 + $0xc8] sm:$0xff]
    %v48 = vld [vmem:[%s0 + $0xd0] sm:$0xff]
    %v49 = vld [vmem:[%s0 + $0xd8] sm:$0xff]
    %v50 = vld [vmem:[%s0 + $0xe0] sm:$0xff]
    %v51 = vld [vmem:[%s0 + $0xe8] sm:$0xff]
    %v52 = vld [vmem:[%s0 + $0xf0] sm:$0xff]
    %v53 = vld [vmem:[%s0 + $0xf8] sm:$0xff]
    %v54 = vld [vmem:[%s1] sm:$0xff]
    %v55 = vld [vmem:[%s1 + $0x8] sm:$0xff]
    %v56 = vld [vmem:[%s2] sm:$0x1]
    %v58 = vperm.slane %v56, 0
    %vm60 = vcmask 130048
    %v62 = vsel %vm60, %v22, 0
    %v65 = vsel %vm60, %v23, 0
    %v68 = vsel %vm60, %v24, 0
    %v71 = vsel %vm60, %v25, 0
    %v74 = vsel %vm60, %v26, 0
    %v77 = vsel %vm60, %v27, 0
    %v80 = vsel %vm60, %v28, 0
    %v83 = vsel %vm60, %v29, 0
    %v86 = vsel %vm60, %v30, 0
    %v89 = vsel %vm60, %v31, 0
    %v92 = vsel %vm60, %v32, 0
    %v95 = vsel %vm60, %v33, 0
    %v98 = vsel %vm60, %v34, 0
    %v101 = vsel %vm60, %v35, 0
    %v104 = vsel %vm60, %v36, 0
    %v107 = vsel %vm60, %v37, 0
    %v110 = vsel %vm60, %v38, 0
    %v113 = vsel %vm60, %v39, 0
    %v116 = vsel %vm60, %v40, 0
    %v119 = vsel %vm60, %v41, 0
    %v122 = vsel %vm60, %v42, 0
    %v125 = vsel %vm60, %v43, 0
    %v128 = vsel %vm60, %v44, 0
    %v131 = vsel %vm60, %v45, 0
    %v134 = vsel %vm60, %v46, 0
    %v137 = vsel %vm60, %v47, 0
    %v140 = vsel %vm60, %v48, 0
    %v143 = vsel %vm60, %v49, 0
    %v146 = vsel %vm60, %v50, 0
    %v149 = vsel %vm60, %v51, 0
    %v152 = vsel %vm60, %v52, 0
    %v155 = vsel %vm60, %v53, 0
    %157 = vmatpush.msra.mxu0 0.0
    %158 = vmatpush.msra.mxu0 0.0
    %159 = vmatpush.msra.mxu0 0.0
    %160 = vmatpush.msra.mxu0 0.0
    %161 = vmatpush.msra.mxu0 0.0
    %162 = vmatpush.msra.mxu0 0.0
    %163 = vmatpush.msra.mxu0 0.0
    %164 = vmatpush.msra.mxu0 0.0
    %165 = vmatpush.msra.mxu0 0.0
    %166 = vmatpush.msra.mxu0 0.0
    %167 = vmatpush.msra.mxu0 0.0
    %168 = vmatpush.msra.mxu0 0.0
    %169 = vmatpush.msra.mxu0 0.0
    %170 = vmatpush.msra.mxu0 0.0
    %171 = vmatpush.msra.mxu0 %v55
    %172 = vmatpush.msra.mxu0 %v54
    %173 = vmatmul.f32.gmra.mxu0 %v62
    %v174 = vpop.f32.mrf.mxu0
    %v175 = vadd.f32 %v58, %v174
    %176 = vmatmul.f32.gmra.mxu0 %v65
    %v177 = vpop.f32.mrf.mxu0
    %v178 = vadd.f32 %v58, %v177
    %179 = vmatmul.f32.gmra.mxu0 %v68
    %v180 = vpop.f32.mrf.mxu0
    %v181 = vadd.f32 %v58, %v180
    %182 = vmatmul.f32.gmra.mxu0 %v71
    %v183 = vpop.f32.mrf.mxu0
    %v184 = vadd.f32 %v58, %v183
    %185 = vmatmul.f32.gmra.mxu0 %v74
    %v186 = vpop.f32.mrf.mxu0
    %v187 = vadd.f32 %v58, %v186
    %188 = vmatmul.f32.gmra.mxu0 %v77
    %v189 = vpop.f32.mrf.mxu0
    %v190 = vadd.f32 %v58, %v189
    %191 = vmatmul.f32.gmra.mxu0 %v80
    %v192 = vpop.f32.mrf.mxu0
    %v193 = vadd.f32 %v58, %v192
    %194 = vmatmul.f32.gmra.mxu0 %v83
    %v195 = vpop.f32.mrf.mxu0
    %v196 = vadd.f32 %v58, %v195
    %197 = vmatmul.f32.gmra.mxu0 %v86
    %v198 = vpop.f32.mrf.mxu0
    %v199 = vadd.f32 %v58, %v198
    %200 = vmatmul.f32.gmra.mxu0 %v89
    %v201 = vpop.f32.mrf.mxu0
    %v202 = vadd.f32 %v58, %v201
    %203 = vmatmul.f32.gmra.mxu0 %v92
    %v204 = vpop.f32.mrf.mxu0
    %v205 = vadd.f32 %v58, %v204
    %206 = vmatmul.f32.gmra.mxu0 %v95
    %v207 = vpop.f32.mrf.mxu0
    %v208 = vadd.f32 %v58, %v207
    %209 = vmatmul.f32.gmra.mxu0 %v98
    %v210 = vpop.f32.mrf.mxu0
    %v211 = vadd.f32 %v58, %v210
    %212 = vmatmul.f32.gmra.mxu0 %v101
    %v213 = vpop.f32.mrf.mxu0
    %v214 = vadd.f32 %v58, %v213
    %215 = vmatmul.f32.gmra.mxu0 %v104
    %v216 = vpop.f32.mrf.mxu0
    %v217 = vadd.f32 %v58, %v216
    %218 = vmatmul.f32.gmra.mxu0 %v107
    %v219 = vpop.f32.mrf.mxu0
    %v220 = vadd.f32 %v58, %v219
    %221 = vmatmul.f32.gmra.mxu0 %v110
    %v222 = vpop.f32.mrf.mxu0
    %v223 = vadd.f32 %v58, %v222
    %224 = vmatmul.f32.gmra.mxu0 %v113
    %v225 = vpop.f32.mrf.mxu0
    %v226 = vadd.f32 %v58, %v225
    %227 = vmatmul.f32.gmra.mxu0 %v116
    %v228 = vpop.f32.mrf.mxu0
    %v229 = vadd.f32 %v58, %v228
    %230 = vmatmul.f32.gmra.mxu0 %v119
    %v231 = vpop.f32.mrf.mxu0
    %v232 = vadd.f32 %v58, %v231
    %233 = vmatmul.f32.gmra.mxu0 %v122
    %v234 = vpop.f32.mrf.mxu0
    %v235 = vadd.f32 %v58, %v234
    %236 = vmatmul.f32.gmra.mxu0 %v125
    %v237 = vpop.f32.mrf.mxu0
    %v238 = vadd.f32 %v58, %v237
    %239 = vmatmul.f32.gmra.mxu0 %v128
    %v240 = vpop.f32.mrf.mxu0
    %v241 = vadd.f32 %v58, %v240
    %242 = vmatmul.f32.gmra.mxu0 %v131
    %v243 = vpop.f32.mrf.mxu0
    %v244 = vadd.f32 %v58, %v243
    %245 = vmatmul.f32.gmra.mxu0 %v134
    %v246 = vpop.f32.mrf.mxu0
    %v247 = vadd.f32 %v58, %v246
    %248 = vmatmul.f32.gmra.mxu0 %v137
    %v249 = vpop.f32.mrf.mxu0
    %v250 = vadd.f32 %v58, %v249
    %251 = vmatmul.f32.gmra.mxu0 %v140
    %v252 = vpop.f32.mrf.mxu0
    %v253 = vadd.f32 %v58, %v252
    %254 = vmatmul.f32.gmra.mxu0 %v143
    %v255 = vpop.f32.mrf.mxu0
    %v256 = vadd.f32 %v58, %v255
    %257 = vmatmul.f32.gmra.mxu0 %v146
    %v258 = vpop.f32.mrf.mxu0
    %v259 = vadd.f32 %v58, %v258
    %260 = vmatmul.f32.gmra.mxu0 %v149
    %v261 = vpop.f32.mrf.mxu0
    %v262 = vadd.f32 %v58, %v261
    %263 = vmatmul.f32.gmra.mxu0 %v152
    %v264 = vpop.f32.mrf.mxu0
    %v265 = vadd.f32 %v58, %v264
    %266 = vmatmul.f32.gmra.mxu0 %v155
    %v267 = vpop.f32.mrf.mxu0
    %v268 = vadd.f32 %v58, %v267
    %269 = vdwg.mxu0
    %v270 = vmax.f32 %v175, 0.0
    %v271 = vmax.f32 %v178, 0.0
    %v272 = vmax.f32 %v181, 0.0
    %v273 = vmax.f32 %v184, 0.0
    %v274 = vmax.f32 %v187, 0.0
    %v275 = vmax.f32 %v190, 0.0
    %v276 = vmax.f32 %v193, 0.0
    %v277 = vmax.f32 %v196, 0.0
    %v278 = vmax.f32 %v199, 0.0
    %v279 = vmax.f32 %v202, 0.0
    %v280 = vmax.f32 %v205, 0.0
    %v281 = vmax.f32 %v208, 0.0
    %v282 = vmax.f32 %v211, 0.0
    %v283 = vmax.f32 %v214, 0.0
    %v284 = vmax.f32 %v217, 0.0
    %v285 = vmax.f32 %v220, 0.0
    %v286 = vmax.f32 %v223, 0.0
    %v287 = vmax.f32 %v226, 0.0
    %v288 = vmax.f32 %v229, 0.0
    %v289 = vmax.f32 %v232, 0.0
    %v290 = vmax.f32 %v235, 0.0
    %v291 = vmax.f32 %v238, 0.0
    %v292 = vmax.f32 %v241, 0.0
    %v293 = vmax.f32 %v244, 0.0
    %v294 = vmax.f32 %v247, 0.0
    %v295 = vmax.f32 %v250, 0.0
    %v296 = vmax.f32 %v253, 0.0
    %v297 = vmax.f32 %v256, 0.0
    %v298 = vmax.f32 %v259, 0.0
    %v299 = vmax.f32 %v262, 0.0
    %v300 = vmax.f32 %v265, 0.0
    %v301 = vmax.f32 %v268, 0.0
    %v302 = vld [vmem:[%s3] sm:$0x1]
    %s303 = sld [smem:[#allocation2]]
    %v304 = vstv %s303
    %vm305 = vcmask 261120
    %v307 = vsel %vm305, %v302, 0
    %v310 = vsel %vm305, %v270, 0
    %v313 = vsel %vm305, %v271, 0
    %v316 = vsel %vm305, %v272, 0
    %v319 = vsel %vm305, %v273, 0
    %v322 = vsel %vm305, %v274, 0
    %v325 = vsel %vm305, %v275, 0
    %v328 = vsel %vm305, %v276, 0
    %v331 = vsel %vm305, %v277, 0
    %v334 = vsel %vm305, %v278, 0
    %v337 = vsel %vm305, %v279, 0
    %v340 = vsel %vm305, %v280, 0
    %v343 = vsel %vm305, %v281, 0
    %v346 = vsel %vm305, %v282, 0
    %v349 = vsel %vm305, %v283, 0
    %v352 = vsel %vm305, %v284, 0
    %v355 = vsel %vm305, %v285, 0
    %v358 = vsel %vm305, %v286, 0
    %v361 = vsel %vm305, %v287, 0
    %v364 = vsel %vm305, %v288, 0
    %v367 = vsel %vm305, %v289, 0
    %v370 = vsel %vm305, %v290, 0
    %v373 = vsel %vm305, %v291, 0
    %v376 = vsel %vm305, %v292, 0
    %v379 = vsel %vm305, %v293, 0
    %v382 = vsel %vm305, %v294, 0
    %v385 = vsel %vm305, %v295, 0
    %v388 = vsel %vm305, %v296, 0
    %v391 = vsel %vm305, %v297, 0
    %v394 = vsel %vm305, %v298, 0
    %v397 = vsel %vm305, %v299, 0
    %v400 = vsel %vm305, %v300, 0
    %v403 = vsel %vm305, %v301, 0
    %405 = vmatpush.xpose.msra.mxu0 %v355
    %406 = vmatpush.xpose.msra.mxu0 %v352
    %407 = vmatpush.xpose.msra.mxu0 %v349
    %408 = vmatpush.xpose.msra.mxu0 %v346
    %409 = vmatpush.xpose.msra.mxu0 %v343
    %410 = vmatpush.xpose.msra.mxu0 %v340
    %411 = vmatpush.xpose.msra.mxu0 %v337
    %412 = vmatpush.xpose.msra.mxu0 %v334
    %413 = vmatpush.xpose.msra.mxu0 %v331
    %414 = vmatpush.xpose.msra.mxu0 %v328
    %415 = vmatpush.xpose.msra.mxu0 %v325
    %416 = vmatpush.xpose.msra.mxu0 %v322
    %417 = vmatpush.xpose.msra.mxu0 %v319
    %418 = vmatpush.xpose.msra.mxu0 %v316
    %419 = vmatpush.xpose.msra.mxu0 %v313
    %420 = vmatpush.xpose.msra.mxu0 %v310
    %421 = vmatmul.f32.gmra.mxu0 %v307
    %v422 = vpop.f32.mrf.mxu0
    %v423 = vadd.f32 %v304, %v422
    %424 = vdwg.mxu0
    %425 = vmatpush.xpose.msra.mxu0 %v403
    %426 = vmatpush.xpose.msra.mxu0 %v400
    %427 = vmatpush.xpose.msra.mxu0 %v397
    %428 = vmatpush.xpose.msra.mxu0 %v394
    %429 = vmatpush.xpose.msra.mxu0 %v391
    %430 = vmatpush.xpose.msra.mxu0 %v388
    %431 = vmatpush.xpose.msra.mxu0 %v385
    %432 = vmatpush.xpose.msra.mxu0 %v382
    %433 = vmatpush.xpose.msra.mxu0 %v379
    %434 = vmatpush.xpose.msra.mxu0 %v376
    %435 = vmatpush.xpose.msra.mxu0 %v373
    %436 = vmatpush.xpose.msra.mxu0 %v370
    %437 = vmatpush.xpose.msra.mxu0 %v367
    %438 = vmatpush.xpose.msra.mxu0 %v364
    %439 = vmatpush.xpose.msra.mxu0 %v361
    %440 = vmatpush.xpose.msra.mxu0 %v358
    %441 = vmatmul.f32.gmra.mxu0 %v307
    %v442 = vpop.f32.mrf.mxu0
    %v443 = vadd.f32 %v304, %v442
    %444 = vdwg.mxu0
    %v445 = vxor.u32 %v423, 2147483648
    %v446 = vxor.u32 %v443, 2147483648
    %v447 = vmul.f32 %v445, 1.442695
    %v448 = vpow.pop %v447
    %v449 = vmul.f32 %v446, 1.442695
    %v450 = vpow.pop %v449
    %v451 = vadd.f32 %v448, 1.0
    %v452 = vadd.f32 %v450, 1.0
    %v453 = vrcp.pop %v451
    %v454 = vmul.f32 %v451, %v453
    %v455 = vsub.f32 1.0, %v454
    %v456 = vmul.f32 %v453, %v455
    %v457 = vadd.f32 %v453, %v456
    %vm458 = vweird.f32 %v451
    %vm459 = vweird.f32 %v453
    %vm460 = vmor %vm458, %vm459
    %v461 = vsel %vm460, %v453, %v457
    %v462 = vand.u32 2147483647, %v451
    %vm463 = vcmp.eq.f32.partialorder %v462, 8.507059e+37
    %v464 = vand.u32 %v451, 2147483648
    %v465 = vor.u32 1.1754944e-38, %v464
    %v466 = vsel %vm463, %v465, %v461
    %v467 = vmul.f32 1.0, %v466
    %v468 = vrcp.pop %v452
    %v469 = vmul.f32 %v452, %v468
    %v470 = vsub.f32 1.0, %v469
    %v471 = vmul.f32 %v468, %v470
    %v472 = vadd.f32 %v468, %v471
    %vm473 = vweird.f32 %v452
    %vm474 = vweird.f32 %v468
    %vm475 = vmor %vm473, %vm474
    %v476 = vsel %vm475, %v468, %v472
    %v477 = vand.u32 2147483647, %v452
    %vm478 = vcmp.eq.f32.partialorder %v477, 8.507059e+37
    %v479 = vand.u32 %v452, 2147483648
    %v480 = vor.u32 1.1754944e-38, %v479
    %v481 = vsel %vm478, %v480, %v476
    %v482 = vmul.f32 1.0, %v481
    %v485 = vrot.slane %v482, 7
    %vm486 = vcmask 1040384
    %v487 = vsel %vm486, %v467, %v485
    %v489 = vlaneseq
    %vm490 = vcmp.ge.s32.totalorder %v489, 0
    %vm491 = vcmp.lt.s32.totalorder %v489, 256
    %vm492 = vmand %vm490, %vm491
    %493 = vst.msk [vmem:[#allocation3] sm:$0x3] %vm492, %v487
    // Predicated region
    $region22: #{mlp_forward.1} parent=1 // pred_check
      _
    $region23: #{mlp_forward.1} parent=1 // pred_check_branch
      %495 = sbr.rel (0) target = $region25
    $region24: #{mlp_forward.1} parent=1 // pred_region
      %497 = vsyncadd [#allocation4], 0
      %s499 = sshll.u32 [#allocation3], 4
      %s500 = int_to_ptr.vmem [resolvable:$true] %s499
      %s501 = sshll.u32 %s5, 4
      %s502 = int_to_ptr.hbm [resolvable:$true] %s501
      %504 = dma.vmem_to_hbm [thread:$0]  %s500, 32, %s502, [#allocation4]
    $region25: #{mlp_forward.1} parent=1 // pred_fallthru
      _
    // Predicated region
    $region26: #{mlp_forward.1} parent=1 // pred_check
      _
    $region27: #{mlp_forward.1} parent=1 // pred_check_branch
      %506 = sbr.rel (0) target = $region29
    $region28: #{mlp_forward.1} parent=1 // pred_region
      %508 = dma.done [#allocation4], 32
    $region29: #{mlp_forward.1} parent=1 // pred_fallthru
      _
    %509 = vsyncpa [#allocation4], 1

</llo_original>
